<compile_context>
chip_gen: v7x
topology: tpu7x:2x2x1
jax: 0.10.0
libtpu: 0.0.40
codegen_flags: <defaults>
</compile_context>

<pallas_src>
import functools
import math

import jax
import jax.numpy as jnp
from jax.experimental import pallas as pl
from jax.experimental.pallas import tpu as pltpu


def _round_up(x: int, m: int) -> int:
    return ((x + m - 1) // m) * m


def _cdiv(a: int, b: int) -> int:
    return (a + b - 1) // b


def _pos_enc_kernel(x_ref, w_ref, ph_ref, o_ref, *, max_len: int):
    # x_ref : (blk, K)  int32 positions (fold real cols + zero-padded dummy cols)
    # w_ref : (K, F)    f32 block-diagonal expansion*div_term matrix (grid-resident)
    # ph_ref: (1, F)    f32 phase per column: 0 (sin cols) / pi/2 (cos cols)
    # o_ref : (blk, F)  lane-dense packed output
    #
    # x.long().clamp(1, max_len) - 1, as float.
    pos = (jnp.clip(x_ref[...], 1, max_len) - 1).astype(jnp.float32)
    # Lane expansion + div_term scaling fused into one tiny MXU matmul (f32 acc);
    # only one VPU add and one EUP sin remain per output element.
    angle = jnp.dot(pos, w_ref[...], preferred_element_type=jnp.float32) + ph_ref[...]
    o_ref[...] = jnp.sin(angle).astype(o_ref.dtype)


def positional_encoder(x, d_model: int, max_len: int = 366,
                       block_rows: int = 4096, out_dtype=jnp.float32):
    """x: positions of any shape / numeric dtype. Returns x.shape + (d_model,).

    out_dtype=jnp.bfloat16 halves writeback traffic if the consumer tolerates it.
    """
    assert d_model % 2 == 0, "d_model must be even"
    orig_shape = tuple(x.shape)
    N = int(math.prod(orig_shape)) if orig_shape else 1

    # Fold consecutive logical rows into the 128-lane axis when d_model is narrow,
    # so stores are full-width (unmasked) vst.
    if d_model < 128 and 128 % d_model == 0:
        fold = 128 // d_model
    else:
        fold = 1
    F = fold * d_model

    # Packed-row geometry: pad only to a sublane multiple (8), not to the block.
    R = _cdiv(N, fold)
    R_pad = _round_up(R, 8)
    N_pad = R_pad * fold

    # Contraction dim for the MXU expansion matmul, padded to >= 8 sublanes.
    K = max(fold, 8)

    # Tile sizing from a VMEM budget (double-buffered output + input, f32),
    # staying under the smallest default scoped-VMEM (16 MiB on v5e); then cap
    # so the grid keeps >= 2 steps for v7x megacore sharding of the parallel axis.
    vmem_budget = 12 * 1024 * 1024
    bytes_per_row = 2 * 4 * (F + K)
    blk = min(_round_up(block_rows, 8),
              max(8, (vmem_budget // bytes_per_row) // 8 * 8))
    blk = max(8, min(blk, _round_up(_cdiv(R_pad, 2), 8)))
    grid = (_cdiv(R_pad, blk),)

    # Positions: .long() truncates toward zero; int32 matches for the positive,
    # day-of-year-scale positions this module is used with.
    x_flat = x.reshape(N).astype(jnp.int32)
    if N_pad != N:
        x_flat = jnp.pad(x_flat, (0, N_pad - N), constant_values=1)
    x_packed = x_flat.reshape(R_pad, fold)
    if K != fold:
        x_packed = jnp.pad(x_packed, ((0, 0), (0, K - fold)), constant_values=1)

    # Column-only constants (host-side):
    #   div_term_full[j] = exp((j - j%2) * -(ln(10000)/d_model)) == div_term[j//2]
    #   phase[j]         = (j % 2) * pi/2     (sin for even cols, cos for odd cols)
    j = jnp.arange(d_model)
    div_full = jnp.exp((j - (j % 2)).astype(jnp.float32) * (-(math.log(10000.0) / d_model)))
    w = jnp.kron(jnp.eye(fold, dtype=jnp.float32), div_full[None, :])    # (fold, F)
    if K != fold:
        w = jnp.pad(w, ((0, K - fold), (0, 0)))                          # (K, F)
    ph = jnp.tile((j % 2).astype(jnp.float32) * (math.pi / 2.0), fold)[None, :]  # (1, F)

    kernel = functools.partial(_pos_enc_kernel, max_len=max_len)

    out_packed = pl.pallas_call(
        kernel,
        out_shape=jax.ShapeDtypeStruct((R_pad, F), out_dtype),
        grid_spec=pltpu.PrefetchScalarGridSpec(
            num_scalar_prefetch=0,
            grid=grid,
            in_specs=[
                pl.BlockSpec((blk, K), lambda i: (i, 0)),   # positions
                pl.BlockSpec((K, F), lambda i: (0, 0)),     # W (grid-resident)
                pl.BlockSpec((1, F), lambda i: (0, 0)),     # phase (grid-resident)
            ],
            out_specs=pl.BlockSpec((blk, F), lambda i: (i, 0)),
        ),
        compiler_params=pltpu.CompilerParams(
            dimension_semantics=("parallel",),
        ),
    )(x_packed, w, ph)

    # Packed (R_pad, fold*d_model) row-major is identical memory to (N_pad, d_model).
    out = out_packed.reshape(N_pad, d_model)
    if N_pad != N:
        out = out[:N]
    return out.reshape(orig_shape + (d_model,))


def _reference(x, d_model, max_len=366):
    # Pure-JAX reference mirroring the PyTorch buffer + gather.
    position = jnp.arange(max_len, dtype=jnp.float32)[:, None]
    div_term = jnp.exp(
        jnp.arange(0, d_model, 2, dtype=jnp.float32) * -(math.log(10000.0) / d_model)
    )
    pe = jnp.zeros((max_len, d_model), jnp.float32)
    pe = pe.at[:, 0::2].set(jnp.sin(position * div_term))
    pe = pe.at[:, 1::2].set(jnp.cos(position * div_term))
    idx = jnp.clip(x.astype(jnp.int32), 1, max_len) - 1
    return pe[idx]


if __name__ == "__main__":
    key = jax.random.PRNGKey(0)
    max_len = 366

    ok = True
    # Case 1: narrow d_model -> lane-folded (fold=4), padded contraction (K=8).
    # Case 2: ragged N (padding + ragged-grid path) with d_model=128 (fold=1),
    #         2-step grid so the parallel axis is exercised.
    for (B, T, d_model) in [(2, 8, 32), (3, 5, 128)]:
        kx = jax.random.fold_in(key, d_model)
        # Positions (e.g. day-of-year), float on purpose to exercise .long()+clamp.
        x = jax.random.uniform(kx, (B, T), minval=0.0, maxval=400.0, dtype=jnp.float32)

        out = positional_encoder(x, d_model=d_model, max_len=max_len)
        out = jax.block_until_ready(out)

        ref = _reference(x, d_model, max_len)
        assert out.shape == (B, T, d_model), out.shape
        # Slightly looser tolerance: cos(a) is computed as sin(a + pi/2).
        ok = ok and bool(jnp.allclose(out, ref, atol=1e-4, rtol=1e-4))

    assert ok, "mismatch vs reference"
    print("KERNEL_OK")
</pallas_src>

<mosaic_0001>
module attributes {stable_mosaic.version = 11 : i64} {
  func.func @_pos_enc_kernel(%arg0: i32, %arg1: memref<8x8xi32, #tpu.memory_space<vmem>>, %arg2: memref<8x128xf32, #tpu.memory_space<vmem>>, %arg3: memref<1x128xf32, #tpu.memory_space<vmem>>, %arg4: memref<8x128xf32, #tpu.memory_space<vmem>>) attributes {dimension_semantics = [#tpu.dimension_semantics<parallel>], iteration_bounds = array<i64: 1>, scalar_prefetch = 0 : i64, scratch_operands = 0 : i64, tpu.core_type = #tpu.core_type<tc>, window_params = [{transform_indices = @transform_0, window_bounds = array<i64: 8, 8>}, {pipeline_mode = #tpu.pipeline_mode<synchronous>, transform_indices = @transform_1, window_bounds = array<i64: 8, 128>}, {pipeline_mode = #tpu.pipeline_mode<synchronous>, transform_indices = @transform_2, window_bounds = array<i64: 1, 128>}, {transform_indices = @transform_3, window_bounds = array<i64: 8, 128>}]} {
    %c0 = arith.constant 0 : index
    %c0_0 = arith.constant 0 : index
    %0 = vector.load %arg1[%c0, %c0_0] : memref<8x8xi32, #tpu.memory_space<vmem>>, vector<8x8xi32>
    %c1_i32 = arith.constant 1 : i32
    %c366_i32 = arith.constant 366 : i32
    %1 = vector.broadcast %c1_i32 : i32 to vector<8x8xi32>
    %2 = arith.maxsi %1, %0 : vector<8x8xi32>
    %3 = vector.broadcast %c366_i32 : i32 to vector<8x8xi32>
    %4 = arith.minsi %3, %2 : vector<8x8xi32>
    %c1_i32_1 = arith.constant 1 : i32
    %5 = vector.broadcast %c1_i32_1 : i32 to vector<8x8xi32>
    %6 = arith.subi %4, %5 : vector<8x8xi32>
    %7 = arith.sitofp %6 : vector<8x8xi32> to vector<8x8xf32>
    %c0_2 = arith.constant 0 : index
    %c0_3 = arith.constant 0 : index
    %8 = vector.load %arg2[%c0_2, %c0_3] : memref<8x128xf32, #tpu.memory_space<vmem>>, vector<8x128xf32>
    %cst = arith.constant dense<0.000000e+00> : vector<8x128xf32>
    %9 = tpu.matmul %7, %8, %cst {dimension_numbers = #tpu.dot_dimension_numbers<[1], [0], [0], [1], [0, 0, 1, 1], [], []>} : vector<8x8xf32>, vector<8x128xf32>, vector<8x128xf32> -> vector<8x128xf32>
    %c0_4 = arith.constant 0 : index
    %c0_5 = arith.constant 0 : index
    %10 = vector.load %arg3[%c0_4, %c0_5] : memref<1x128xf32, #tpu.memory_space<vmem>>, vector<1x128xf32>
    %11 = vector.broadcast %10 : vector<1x128xf32> to vector<8x128xf32>
    %12 = arith.addf %9, %11 : vector<8x128xf32>
    %13 = math.sin %12 : vector<8x128xf32>
    %c0_6 = arith.constant 0 : index
    %c0_7 = arith.constant 0 : index
    %14 = vector.load %arg4[%c0_6, %c0_7] : memref<8x128xf32, #tpu.memory_space<vmem>>, vector<8x128xf32>
    tpu.vector_store %arg4[%c0_6, %c0_7], %13 {strides = array<i32>} : memref<8x128xf32, #tpu.memory_space<vmem>>, vector<8x128xf32>,
    return
  }
  func.func @transform_0(%arg0: i32) -> (i32, i32) {
    %c0_i32 = arith.constant 0 : i32
    %c0_i32_0 = arith.constant 0 : i32
    return %arg0, %c0_i32 : i32, i32
  }
  func.func @transform_1(%arg0: i32) -> (i32, i32) {
    %c0_i32 = arith.constant 0 : i32
    %c0_i32_0 = arith.constant 0 : i32
    %c0_i32_1 = arith.constant 0 : i32
    return %c0_i32, %c0_i32_0 : i32, i32
  }
  func.func @transform_2(%arg0: i32) -> (i32, i32) {
    %c0_i32 = arith.constant 0 : i32
    %c0_i32_0 = arith.constant 0 : i32
    %c0_i32_1 = arith.constant 0 : i32
    return %c0_i32, %c0_i32_0 : i32, i32
  }
  func.func @transform_3(%arg0: i32) -> (i32, i32) {
    %c0_i32 = arith.constant 0 : i32
    %c0_i32_0 = arith.constant 0 : i32
    return %arg0, %c0_i32 : i32, i32
  }
}

</mosaic_0001>

<llo_original>
// kernel: tpu_custom_call.1
$region0: #{tpu_custom_call.1}
  #allocation0 [shape = 'u32[]', space=smem, size = 0x4, offset = 0x4, fixed_abs, tag = 'smem constant byte address 0x4 - core index']
  #allocation1 [shape = 'u32[144,128]{1,0:T(1,128)}', space=vmem, size = 0x12000, scoped, tag = 'internal scratch']
  %s0 = inlined_call_operand.hbm [shape: s32[8,8], index: 0, kind: input, shape index: {}]
  %s1 = inlined_call_operand.hbm [shape: f32[8,128], index: 1, kind: input, shape index: {}]
  %s2 = inlined_call_operand.vmem [shape: f32[1,128], index: 2, kind: input, shape index: {}]
  %s3 = inlined_call_operand.hbm [shape: f32[8,128], index: 3, kind: output, shape index: {}]
  %s4 = sld [smem:[#allocation0]]
  $region30: #{tpu_custom_call.1} parent=0
    _
  %s6 = ssub.s32 1, %s4
  %s7 = scalar_select 0, %s6, %s4
  $region1: #{tpu_custom_call.1} parent=0
    #allocation2 [shape = 'u8[4096]{0}', space=vmem, size = 0x1000, scoped, tag = 'input window, operand 0, single buffered']
    #allocation3 [shape = 's32[1]{0}', space=sflag, size = 0x4, scoped, tag = 'scoped memory for tpu_custom_call.1']
    #allocation4 [shape = 's32[1]{0}', space=sflag, size = 0x4, scoped, tag = 'scoped memory for tpu_custom_call.1']
    #allocation5 [shape = 'u8[4096]{0}', space=vmem, size = 0x1000, scoped, tag = 'input window, operand 1, single buffered']
    #allocation6 [shape = 's32[1]{0}', space=sflag, size = 0x4, scoped, tag = 'scoped memory for tpu_custom_call.1']
    #allocation7 [shape = 'u8[4096]{0}', space=vmem, size = 0x1000, scoped, tag = 'output window, operand 0, single buffered']
    %8 = vsyncpa [#allocation3], 0
    %9 = vsyncpa [#allocation6], 0
    %10 = vsyncpa [#allocation4], 0
    // Predicated region
    $region2: #{tpu_custom_call.1} parent=1 // pred_check
      _
    $region3: #{tpu_custom_call.1} parent=1 // pred_check_branch
      %12 = sbr.rel (0) target = $region5
    $region4: #{tpu_custom_call.1} parent=1 // pred_region
      %s14 = ssub.s32 128, 128
      %15 = vsyncadd [#allocation3], %s14
      %s17 = sshll.u32 [#allocation2], 4
      %s18 = int_to_ptr.vmem [resolvable:$true] %s17
      %20 = dma.hbm_to_vmem [thread:$0]  %s0, 128, %s18, [#allocation3]
    $region5: #{tpu_custom_call.1} parent=1 // pred_fallthru
      _
    // Predicated region
    $region6: #{tpu_custom_call.1} parent=1 // pred_check
      _
    $region7: #{tpu_custom_call.1} parent=1 // pred_check_branch
      %22 = sbr.rel (0) target = $region9
    $region8: #{tpu_custom_call.1} parent=1 // pred_region
      %s24 = ssub.s32 128, 128
      %25 = vsyncadd [#allocation6], %s24
      %s27 = sshll.u32 [#allocation5], 4
      %s28 = int_to_ptr.vmem [resolvable:$true] %s27
      %30 = dma.hbm_to_vmem [thread:$0]  %s1, 128, %s28, [#allocation6]
    $region9: #{tpu_custom_call.1} parent=1 // pred_fallthru
      _
    // Predicated region
    $region10: #{tpu_custom_call.1} parent=1 // pred_check
      _
    $region11: #{tpu_custom_call.1} parent=1 // pred_check_branch
      %32 = sbr.rel (0) target = $region13
    $region12: #{tpu_custom_call.1} parent=1 // pred_region
      _
    $region13: #{tpu_custom_call.1} parent=1 // pred_fallthru
      _
    // Predicated region
    $region14: #{tpu_custom_call.1} parent=1 // pred_check
      _
    $region15: #{tpu_custom_call.1} parent=1 // pred_check_branch
      %34 = sbr.rel (0) target = $region17
    $region16: #{tpu_custom_call.1} parent=1 // pred_region
      %35 = dma.done [#allocation3], 128
    $region17: #{tpu_custom_call.1} parent=1 // pred_fallthru
      _
    // Predicated region
    $region18: #{tpu_custom_call.1} parent=1 // pred_check
      _
    $region19: #{tpu_custom_call.1} parent=1 // pred_check_branch
      %37 = sbr.rel (0) target = $region21
    $region20: #{tpu_custom_call.1} parent=1 // pred_region
      %38 = dma.done [#allocation6], 128
    $region21: #{tpu_custom_call.1} parent=1 // pred_fallthru
      _
    %v39 = vld [vmem:[#allocation2] sm:$0xff]
    %vm40 = vcmp.gt.s32.totalorder %v39, 1
    %v41 = vsel %vm40, %v39, 1
    %vm42 = vcmp.lt.s32.totalorder %v41, 366
    %v43 = vsel %vm42, %v41, 366
    %v44 = vsub.s32 %v43, 1
    %v45 = vcvt.s32.f32 %v44
    %v46 = vld [vmem:[#allocation5] sm:$0xff]
    %v47 = vld [vmem:[%s2] sm:$0x1]
    %v49 = vlaneseq
    %v50 = vshrl.u32 %v49, 7
    %v51 = vsub.s32 0, %v50
    %v52 = vrot.slane %v47, %v51
    %vm54 = vcmask 64512
    %v56 = vsel %vm54, %v45, 0
    %58 = vmatprep.subr.mxu0 0.0
    %59 = vmatpush1.msra.mxu0 %v46
    %60 = vmatprep.subr.mxu0 0.0
    %61 = vmatpush1.msra.mxu0 0.0
    %62 = vmatprep.subr.mxu0 0.0
    %63 = vmatpush1.msra.mxu0 0.0
    %64 = vmatprep.subr.mxu0 0.0
    %65 = vmatpush1.msra.mxu0 0.0
    %66 = vmatprep.subr.mxu0 0.0
    %67 = vmatpush1.msra.mxu0 0.0
    %68 = vmatprep.subr.mxu0 0.0
    %69 = vmatpush1.msra.mxu0 0.0
    %70 = vmatprep.subr.mxu0 0.0
    %71 = vmatpush1.msra.mxu0 0.0
    %72 = vmatprep.subr.mxu0 0.0
    %73 = vmatpush1.msra.mxu0 0.0
    %74 = vmatprep.subr.mxu0 0.0
    %75 = vmatpush1.msra.mxu0 0.0
    %76 = vmatprep.subr.mxu0 0.0
    %77 = vmatpush1.msra.mxu0 0.0
    %78 = vmatprep.subr.mxu0 0.0
    %79 = vmatpush1.msra.mxu0 0.0
    %80 = vmatprep.subr.mxu0 0.0
    %81 = vmatpush1.msra.mxu0 0.0
    %82 = vmatprep.subr.mxu0 0.0
    %83 = vmatpush1.msra.mxu0 0.0
    %84 = vmatprep.subr.mxu0 0.0
    %85 = vmatpush1.msra.mxu0 0.0
    %86 = vmatprep.subr.mxu0 0.0
    %87 = vmatpush1.msra.mxu0 0.0
    %88 = vmatprep.subr.mxu0 0.0
    %89 = vmatpush1.msra.mxu0 0.0
    %90 = vmatprep.subr.mxu0 0.0
    %91 = vmatpush1.msra.mxu0 0.0
    %92 = vmatprep.subr.mxu0 0.0
    %93 = vmatpush1.msra.mxu0 0.0
    %94 = vmatprep.subr.mxu0 0.0
    %95 = vmatpush1.msra.mxu0 0.0
    %96 = vmatprep.subr.mxu0 0.0
    %97 = vmatpush1.msra.mxu0 0.0
    %98 = vmatprep.subr.mxu0 0.0
    %99 = vmatpush1.msra.mxu0 0.0
    %100 = vmatprep.subr.mxu0 0.0
    %101 = vmatpush1.msra.mxu0 0.0
    %102 = vmatprep.subr.mxu0 0.0
    %103 = vmatpush1.msra.mxu0 0.0
    %104 = vmatprep.subr.mxu0 0.0
    %105 = vmatpush1.msra.mxu0 0.0
    %106 = vmatprep.subr.mxu0 0.0
    %107 = vmatpush1.msra.mxu0 0.0
    %108 = vmatprep.subr.mxu0 0.0
    %109 = vmatpush1.msra.mxu0 0.0
    %110 = vmatprep.subr.mxu0 0.0
    %111 = vmatpush1.msra.mxu0 0.0
    %112 = vmatprep.subr.mxu0 0.0
    %113 = vmatpush1.msra.mxu0 0.0
    %114 = vmatprep.subr.mxu0 0.0
    %115 = vmatpush1.msra.mxu0 0.0
    %116 = vmatprep.subr.mxu0 0.0
    %117 = vmatpush1.msra.mxu0 0.0
    %118 = vmatprep.subr.mxu0 0.0
    %119 = vmatpush1.msra.mxu0 0.0
    %120 = vmatprep.subr.mxu0 0.0
    %121 = vmatpush1.msra.mxu0 0.0
    %122 = vmatprep.mubr.f32.mxu0 0.0
    %123 = vmatmul.mubr.f32.gmra.mrb[0].mxu0 %v56
    %v124 = vpop.f32.mrb[0].mxu0
    %v125 = vadd.f32 %v52, %v124
    %v126 = vpop.f32.mrb[0].mxu0
    %127 = vdwg.mxu0
    %v128 = vand.u32 2147483647, %v125
    %vm129 = vcmp.le.f32.partialorder %v128, 0.7853982
    %vm130 = vcmp.lt.s32.totalorder %v125, 0
    %v131 = vand.u32 %v125, 2139095040
    %v132 = vshrl.u32 %v131, 23
    %v133 = vsub.s32 %v132, 127
    %v134 = vand.u32 2147483647, %v125
    %v135 = vand.u32 %v134, 8388607
    %v136 = vor.u32 %v135, 8388608
    %v137 = vsub.s32 0, %v136
    %v138 = vadd.s32 %v133, 1
    %vm139 = vcmp.gt.s32.totalorder %v138, 0
    %v140 = vsel %vm139, %v138, 0
    %v141 = vshrl.u32 %v140, 5
    %v142 = vand.u32 %v140, 31
    %v143 = vsub.s32 32, %v142
    %v144 = vshrl.u32 683565275, %v143
    %v145 = vshll.u32 683565275, %v142
    %v146 = vshrl.u32 2475754826, %v143
    %v147 = vor.u32 %v145, %v146
    %v148 = vshll.u32 2475754826, %v142
    %v149 = vshrl.u32 2131351028, %v143
    %v150 = vor.u32 %v148, %v149
    %v151 = vshll.u32 2131351028, %v142
    %v152 = vshrl.u32 2102212464, %v143
    %v153 = vor.u32 %v151, %v152
    %v154 = vshll.u32 2102212464, %v142
    %v155 = vshrl.u32 920167782, %v143
    %v156 = vor.u32 %v154, %v155
    %v157 = vshll.u32 920167782, %v142
    %v158 = vshrl.u32 1326507024, %v143
    %v159 = vor.u32 %v157, %v158
    %vm160 = vcmp.lt.s32.totalorder %v141, 1
    %vm161 = vcmp.lt.s32.totalorder %v141, 2
    %vm162 = vcmp.lt.s32.totalorder %v141, 3
    %vm163 = vcmp.lt.s32.totalorder %v141, 4
    %v164 = vsel %vm160, %v144, %v147
    %v165 = vsel %vm163, %v153, 2102212464
    %v166 = vsel %vm162, %v150, %v165
    %v167 = vsel %vm161, %v164, %v166
    %v168 = vsel %vm160, %v147, %v150
    %v169 = vsel %vm163, %v156, 920167782
    %v170 = vsel %vm162, %v153, %v169
    %v171 = vsel %vm161, %v168, %v170
    %v172 = vsel %vm160, %v150, %v153
    %v173 = vsel %vm163, %v159, 1326507024
    %v174 = vsel %vm162, %v156, %v173
    %v175 = vsel %vm161, %v172, %v174
    %v176 = vshll.u32 %v136, 8
    %v177 = vmul.u32.u64.compose %v176, %v175
    %v178 = vextract.low.u32 %v177
    %v179 = vextract.high.u32 %v177
    %v180 = vmul.u32.u64.compose %v176, %v171
    %v181 = vextract.low.u32 %v180
    %v182 = vextract.high.u32 %v180
    %v183 = vmul.u32 %v176, %v167
    %v184 = vadd.s32 %v179, %v181
    %vm185 = vc.u32 %v179, %v181
    %v186 = vadd.s32 %v182, 1
    %v187 = vsel %vm185, %v186, %v182
    %v188 = vadd.s32 %v183, %v187
    %v189 = vadd.s32 %v188, 536870912
    %v190 = vshrl.u32 %v189, 30
    %v191 = vshll.u32 %v190, 30
    %v192 = vsub.s32 %v188, %v191
    %vm193 = vcmp.lt.s32.totalorder %v192, 0
    %v194 = vsub.s32 0, %v192
    %v195 = vsel %vm193, %v194, %v192
    %v196 = vclz %v195
    %v197 = vsub.s32 %v196, 2
    %vm198 = vcmp.gt.s32.totalorder 0, %v197
    %v199 = vsel %vm198, 0, %v197
    %v200 = vsub.s32 32, %v199
    %v201 = vshll.u32 %v192, %v199
    %v202 = vshrl.u32 %v184, %v200
    %v203 = vor.u32 %v201, %v202
    %v204 = vsub.s32 4294967266, %v199
    %v205 = vadd.s32 %v204, 127
    %v206 = vshll.u32 %v205, 23
    %v207 = vor.u32 4788187, %v206
    %v208 = vand.u32 2147483647, %v207
    %v210 = vcvt.s32.f32 %v203
    %v211 = vmul.f32 %v210, %v208
    %v212 = vxor.u32 %v211, 2147483648
    %v213 = vsel %vm130, %v212, %v211
    %v214 = vsub.s32 4, %v190
    %v215 = vsel %vm130, %v214, %v190
    %v216 = vsel %vm129, %v125, %v213
    %v217 = vsel %vm129, 0, %v215
    %v218 = vcosq.f32.pop %v216
    %v219 = vsinq.f32.pop %v216
    %vm220 = vweird.f32 %v125
    %v221 = vadd.s32 %v217, 3
    %v222 = vand.u32 %v221, 3
    %vm223 = vcmp.lt.s32.totalorder %v222, 2
    %vm224 = vcmp.eq.s32.totalorder %v222, 0
    %v225 = vxor.u32 %v219, 2147483648
    %v226 = vsel %vm224, %v218, %v225
    %vm227 = vcmp.eq.s32.totalorder %v222, 2
    %v228 = vxor.u32 %v218, 2147483648
    %v229 = vsel %vm227, %v228, %v219
    %v230 = vsel %vm223, %v226, %v229
    %v231 = vsel %vm220, nan, %v230
    %232 = vst [vmem:[#allocation7] sm:$0xff] %v231
    // Predicated region
    $region22: #{tpu_custom_call.1} parent=1 // pred_check
      _
    $region23: #{tpu_custom_call.1} parent=1 // pred_check_branch
      %234 = sbr.rel (0) target = $region25
    $region24: #{tpu_custom_call.1} parent=1 // pred_region
      %s236 = ssub.s32 128, 128
      %237 = vsyncadd [#allocation4], %s236
      %s239 = sshll.u32 [#allocation7], 4
      %s240 = int_to_ptr.vmem [resolvable:$true] %s239
      %242 = dma.vmem_to_hbm [thread:$0]  %s240, 128, %s3, [#allocation4]
    $region25: #{tpu_custom_call.1} parent=1 // pred_fallthru
      _
    // Predicated region
    $region26: #{tpu_custom_call.1} parent=1 // pred_check
      _
    $region27: #{tpu_custom_call.1} parent=1 // pred_check_branch
      %244 = sbr.rel (0) target = $region29
    $region28: #{tpu_custom_call.1} parent=1 // pred_region
      %245 = dma.done [#allocation4], 128
    $region29: #{tpu_custom_call.1} parent=1 // pred_fallthru
      _
    %246 = vsyncpa [#allocation3], 1
    %247 = vsyncpa [#allocation6], 1
    %248 = vsyncpa [#allocation4], 1

</llo_original>
